<compile_context>
chip_gen: v5e
topology: v5e:2x2
jax: 0.10.0
libtpu: 0.0.40
codegen_flags: <defaults>
</compile_context>

<pallas_src>
import functools
import math

import jax
import jax.numpy as jnp
from jax.experimental import pallas as pl
from jax.experimental.pallas import tpu as pltpu  # noqa: F401  (TPU backend)

BIG = 9.0e15  # matches 9000000000000000.0 in the PyTorch reference


def _attention_kernel(att_ref, wq_ref, wk_ref, wv_ref, link_ref, out_ref, *,
                      inv_sqrt_dk):
    B, N, low = att_ref.shape
    high = wk_ref.shape[1]
    f32 = jnp.float32

    # --- Projections --------------------------------------------------------
    # Collapse the batch so each projection is ONE 2-D (B*N, low) x (low, X)
    # MXU matmul (no broadcast_to of weights, no per-batch vmatmul streams).
    att2 = att_ref[...].reshape(B * N, low)

    # Fold the 1/sqrt(dk) score scale into the tiny Q weight tile (64 elems)
    # instead of scaling the whole (B, low, high) score slab later.
    wq_s = wq_ref[...] * f32(inv_sqrt_dk)

    q = jnp.dot(att2, wq_s, preferred_element_type=f32).reshape(B, N, low)
    k = jnp.dot(att2, wk_ref[...], preferred_element_type=f32).reshape(B, N, high)
    v = jnp.dot(att2, wv_ref[...], preferred_element_type=f32).reshape(B, N, low)

    # --- Scores: e = (Q / sqrt(dk))^T K  -> (B, low, high) -------------------
    # One tiny in-kernel transpose of Q (XLU slot is idle; MXU is the only
    # busy unit), then the canonical batched-matmul contraction.
    qT = jnp.swapaxes(q, 1, 2)                                   # (B, low, N)
    e = jnp.einsum('bln,bnh->blh', qT, k, preferred_element_type=f32)

    # --- Masked min-max norm --------------------------------------------------
    # Mask built once at (low, high); broadcast only inside the where calls.
    mask = (link_ref[...] > 0)[None, :, :]                       # (1, low, high)
    min_v = jnp.min(jnp.where(mask, e, f32(BIG)), axis=-1, keepdims=True)
    max_v = jnp.max(jnp.where(mask, e, f32(-BIG)), axis=-1, keepdims=True)
    denom = max_v - min_v
    denom = jnp.where(denom == 0, f32(1e-6), denom)
    e = (e - min_v) * pl.reciprocal(denom, approx=False)
    e = jnp.where(mask, e, f32(-BIG))

    # --- Softmax over the last dim -------------------------------------------
    # After the min-max norm, in-mask scores are in [0, 1] and masked scores
    # are -BIG, so a constant shift of 1.0 replaces the per-row max reduction
    # (softmax is shift-invariant; exp() stays <= 1, no overflow).
    p = jnp.exp(e - f32(1.0))
    s = jnp.sum(p, axis=-1, keepdims=True)
    # Degenerate all-masked linkage row: reference yields uniform weights
    # (all scores equal -BIG); reproduce that instead of 0/0.
    attention = jnp.where(s > 0,
                          p * pl.reciprocal(s, approx=False),
                          f32(1.0) / f32(high))

    # --- Output: V @ attention -> (B, N, high) --------------------------------
    out_ref[...] = jnp.einsum('bnl,blh->bnh', v, attention,
                              preferred_element_type=f32).astype(out_ref.dtype)


def attention_layer_pallas(att, wq, wk, wv, linkage):
    """att: (B, N, low) f32; wq (low, low), wk (low, high), wv (low, low),
    linkage (low, high).  Returns (B, N, high) f32."""
    B, N, low = att.shape
    high = wk.shape[1]
    inv_sqrt_dk = 1.0 / math.sqrt(float(high))

    kernel = functools.partial(_attention_kernel, inv_sqrt_dk=inv_sqrt_dk)

    # Single invocation (no grid): the whole problem fits in VMEM at these
    # shapes, so per-grid-step overhead would dominate any tiling.  Only
    # `att` and the tiny weights / linkage are DMA'd (no duplicated attT).
    return pl.pallas_call(
        kernel,
        out_shape=jax.ShapeDtypeStruct((B, N, high), jnp.float32),
    )(att.astype(jnp.float32), wq.astype(jnp.float32),
      wk.astype(jnp.float32), wv.astype(jnp.float32),
      linkage.astype(jnp.float32))


def attention_layer_ref(att, wq, wk, wv, linkage):
    """Pure-JAX reference mirroring the PyTorch forward."""
    dk = wk.shape[1]
    Q = jnp.matmul(att, wq)
    K = jnp.matmul(att, wk)
    V = jnp.matmul(att, wv)
    e = jnp.matmul(jnp.transpose(Q, (0, 2, 1)), K) / jnp.sqrt(jnp.float32(dk))
    exp_linkage = jnp.broadcast_to(linkage[None], e.shape)
    pos_e = jnp.where(exp_linkage > 0, e, BIG)
    neg_e = jnp.where(exp_linkage > 0, e, -BIG)
    min_v = jnp.min(pos_e, axis=-1, keepdims=True)
    max_v = jnp.max(neg_e, axis=-1, keepdims=True)
    denom = max_v - min_v
    denom = jnp.where(denom == 0, 1e-6, denom)
    e = (e - min_v) / denom
    e = jnp.where(exp_linkage > 0, e, -BIG)
    attention = jax.nn.softmax(e, axis=-1)
    return jnp.matmul(V, attention)


if __name__ == "__main__":
    # Small shapes consistent with the module: att (B, N, low) -> out (B, N, high)
    B, N, low, high = 2, 8, 8, 16

    key = jax.random.PRNGKey(0)
    k_att, k_wq, k_wk, k_wv, k_link = jax.random.split(key, 5)

    # Deterministic init mirroring reset_parameters: uniform(-std, std), std=1/sqrt(high)
    std = 1.0 / (high ** 0.5)
    wq = jax.random.uniform(k_wq, (low, low), jnp.float32, -std, std)
    wk = jax.random.uniform(k_wk, (low, high), jnp.float32, -std, std)
    wv = jax.random.uniform(k_wv, (low, low), jnp.float32, -std, std)

    # Synthetic linkage mask (low, high); guarantee each row has a positive entry
    linkage = jax.random.uniform(k_link, (low, high), jnp.float32, -1.0, 1.0)
    linkage = linkage.at[:, 0].set(1.0)

    att = jax.random.normal(k_att, (B, N, low), jnp.float32)

    out = attention_layer_pallas(att, wq, wk, wv, linkage)
    out = jax.block_until_ready(out)

    ref = attention_layer_ref(att, wq, wk, wv, linkage)
    assert out.shape == (B, N, high), out.shape
    assert jnp.allclose(out, ref, atol=1e-4, rtol=1e-4), "mismatch vs reference"

    print("KERNEL_OK")
</pallas_src>

<mosaic_0001>
module attributes {stable_mosaic.version = 11 : i64} {
  func.func @_attention_kernel(%arg0: memref<2x8x8xf32, #tpu.memory_space<vmem>>, %arg1: memref<8x8xf32, #tpu.memory_space<vmem>>, %arg2: memref<8x16xf32, #tpu.memory_space<vmem>>, %arg3: memref<8x8xf32, #tpu.memory_space<vmem>>, %arg4: memref<8x16xf32, #tpu.memory_space<vmem>>, %arg5: memref<2x8x16xf32, #tpu.memory_space<vmem>>) attributes {dimension_semantics = [], scalar_prefetch = 0 : i64, scratch_operands = 0 : i64, tpu.core_type = #tpu.core_type<tc>} {
    %c0 = arith.constant 0 : index
    %c0_0 = arith.constant 0 : index
    %c0_1 = arith.constant 0 : index
    %0 = vector.load %arg0[%c0, %c0_0, %c0_1] : memref<2x8x8xf32, #tpu.memory_space<vmem>>, vector<2x8x8xf32>
    %1 = vector.shape_cast %0 : vector<2x8x8xf32> to vector<16x8xf32>
    %c0_2 = arith.constant 0 : index
    %c0_3 = arith.constant 0 : index
    %2 = vector.load %arg1[%c0_2, %c0_3] : memref<8x8xf32, #tpu.memory_space<vmem>>, vector<8x8xf32>
    %cst = arith.constant 2.500000e-01 : f32
    %3 = vector.broadcast %cst : f32 to vector<8x8xf32>
    %4 = arith.mulf %2, %3 : vector<8x8xf32>
    %cst_4 = arith.constant dense<0.000000e+00> : vector<16x8xf32>
    %5 = tpu.matmul %1, %4, %cst_4 {dimension_numbers = #tpu.dot_dimension_numbers<[1], [0], [0], [1], [0, 0, 1, 1], [], []>} : vector<16x8xf32>, vector<8x8xf32>, vector<16x8xf32> -> vector<16x8xf32>
    %6 = vector.shape_cast %5 : vector<16x8xf32> to vector<2x8x8xf32>
    %c0_5 = arith.constant 0 : index
    %c0_6 = arith.constant 0 : index
    %7 = vector.load %arg2[%c0_5, %c0_6] : memref<8x16xf32, #tpu.memory_space<vmem>>, vector<8x16xf32>
    %cst_7 = arith.constant dense<0.000000e+00> : vector<16x16xf32>
    %8 = tpu.matmul %1, %7, %cst_7 {dimension_numbers = #tpu.dot_dimension_numbers<[1], [0], [0], [1], [0, 0, 1, 1], [], []>} : vector<16x8xf32>, vector<8x16xf32>, vector<16x16xf32> -> vector<16x16xf32>
    %9 = vector.shape_cast %8 : vector<16x16xf32> to vector<2x8x16xf32>
    %c0_8 = arith.constant 0 : index
    %c0_9 = arith.constant 0 : index
    %10 = vector.load %arg3[%c0_8, %c0_9] : memref<8x8xf32, #tpu.memory_space<vmem>>, vector<8x8xf32>
    %cst_10 = arith.constant dense<0.000000e+00> : vector<16x8xf32>
    %11 = tpu.matmul %1, %10, %cst_10 {dimension_numbers = #tpu.dot_dimension_numbers<[1], [0], [0], [1], [0, 0, 1, 1], [], []>} : vector<16x8xf32>, vector<8x8xf32>, vector<16x8xf32> -> vector<16x8xf32>
    %12 = vector.shape_cast %11 : vector<16x8xf32> to vector<2x8x8xf32>
    %13 = tpu.transpose %6, [0, 2, 1] : vector<2x8x8xf32> -> vector<2x8x8xf32>
    "tpu.trace_start"() <{level = 10 : i32, message = "bln,bnh->blh"}> : () -> ()
    %cst_11 = arith.constant dense<0.000000e+00> : vector<2x8x16xf32>
    %14 = tpu.matmul %13, %9, %cst_11 {dimension_numbers = #tpu.dot_dimension_numbers<[2], [1], [1], [2], [0, 0, 0, 1, 1, 2], [0], [0]>} : vector<2x8x8xf32>, vector<2x8x16xf32>, vector<2x8x16xf32> -> vector<2x8x16xf32>
    "tpu.trace_stop"() : () -> ()
    %c0_12 = arith.constant 0 : index
    %c0_13 = arith.constant 0 : index
    %15 = vector.load %arg4[%c0_12, %c0_13] : memref<8x16xf32, #tpu.memory_space<vmem>>, vector<8x16xf32>
    %cst_14 = arith.constant 0.000000e+00 : f32
    %16 = vector.broadcast %cst_14 : f32 to vector<8x16xf32>
    %17 = arith.cmpf ogt, %15, %16 : vector<8x16xf32>
    %18 = vector.shape_cast %17 : vector<8x16xi1> to vector<1x8x16xi1>
    %cst_15 = arith.constant 9.000000e+15 : f32
    %19 = vector.shape_cast %18 : vector<1x8x16xi1> to vector<1x8x16xi1>
    %20 = vector.broadcast %19 : vector<1x8x16xi1> to vector<2x8x16xi1>
    %21 = vector.broadcast %cst_15 : f32 to vector<2x8x16xf32>
    %22 = arith.select %20, %14, %21 : vector<2x8x16xi1>, vector<2x8x16xf32>
    %cst_16 = arith.constant dense<0x7F800000> : vector<2x8xf32>
    %23 = vector.multi_reduction <minimumf>, %22, %cst_16 [2] : vector<2x8x16xf32> to vector<2x8xf32>
    %24 = vector.shape_cast %23 : vector<2x8xf32> to vector<2x8x1xf32>
    %cst_17 = arith.constant -9.000000e+15 : f32
    %25 = vector.shape_cast %18 : vector<1x8x16xi1> to vector<1x8x16xi1>
    %26 = vector.broadcast %25 : vector<1x8x16xi1> to vector<2x8x16xi1>
    %27 = vector.broadcast %cst_17 : f32 to vector<2x8x16xf32>
    %28 = arith.select %26, %14, %27 : vector<2x8x16xi1>, vector<2x8x16xf32>
    %cst_18 = arith.constant dense<0xFF800000> : vector<2x8xf32>
    %29 = vector.multi_reduction <maximumf>, %28, %cst_18 [2] : vector<2x8x16xf32> to vector<2x8xf32>
    %30 = vector.shape_cast %29 : vector<2x8xf32> to vector<2x8x1xf32>
    %31 = arith.subf %30, %24 : vector<2x8x1xf32>
    %cst_19 = arith.constant 0.000000e+00 : f32
    %32 = vector.broadcast %cst_19 : f32 to vector<2x8x1xf32>
    %33 = arith.cmpf oeq, %31, %32 : vector<2x8x1xf32>
    %cst_20 = arith.constant 9.99999997E-7 : f32
    %34 = vector.broadcast %cst_20 : f32 to vector<2x8x1xf32>
    %35 = arith.select %33, %34, %31 : vector<2x8x1xi1>, vector<2x8x1xf32>
    %36 = vector.broadcast %24 : vector<2x8x1xf32> to vector<2x8x16xf32>
    %37 = arith.subf %14, %36 : vector<2x8x16xf32>
    %38 = tpu.reciprocal %35 : vector<2x8x1xf32> -> vector<2x8x1xf32>
    %39 = vector.broadcast %38 : vector<2x8x1xf32> to vector<2x8x16xf32>
    %40 = arith.mulf %37, %39 : vector<2x8x16xf32>
    %cst_21 = arith.constant -9.000000e+15 : f32
    %41 = vector.shape_cast %18 : vector<1x8x16xi1> to vector<1x8x16xi1>
    %42 = vector.broadcast %41 : vector<1x8x16xi1> to vector<2x8x16xi1>
    %43 = vector.broadcast %cst_21 : f32 to vector<2x8x16xf32>
    %44 = arith.select %42, %40, %43 : vector<2x8x16xi1>, vector<2x8x16xf32>
    %cst_22 = arith.constant 1.000000e+00 : f32
    %45 = vector.broadcast %cst_22 : f32 to vector<2x8x16xf32>
    %46 = arith.subf %44, %45 : vector<2x8x16xf32>
    %47 = math.exp %46 : vector<2x8x16xf32>
    %cst_23 = arith.constant dense<0.000000e+00> : vector<2x8xf32>
    %48 = vector.multi_reduction <add>, %47, %cst_23 [2] : vector<2x8x16xf32> to vector<2x8xf32>
    %49 = vector.shape_cast %48 : vector<2x8xf32> to vector<2x8x1xf32>
    %cst_24 = arith.constant 0.000000e+00 : f32
    %50 = vector.broadcast %cst_24 : f32 to vector<2x8x1xf32>
    %51 = arith.cmpf ogt, %49, %50 : vector<2x8x1xf32>
    %52 = tpu.reciprocal %49 : vector<2x8x1xf32> -> vector<2x8x1xf32>
    %53 = vector.broadcast %52 : vector<2x8x1xf32> to vector<2x8x16xf32>
    %54 = arith.mulf %47, %53 : vector<2x8x16xf32>
    %cst_25 = arith.constant 1.000000e+00 : f32
    %cst_26 = arith.constant 1.600000e+01 : f32
    %55 = arith.divf %cst_25, %cst_26 : f32
    %56 = vector.shape_cast %51 : vector<2x8x1xi1> to vector<2x8x1xi1>
    %57 = vector.broadcast %56 : vector<2x8x1xi1> to vector<2x8x16xi1>
    %58 = vector.broadcast %55 : f32 to vector<2x8x16xf32>
    %59 = arith.select %57, %54, %58 : vector<2x8x16xi1>, vector<2x8x16xf32>
    "tpu.trace_start"() <{level = 10 : i32, message = "bnl,blh->bnh"}> : () -> ()
    %cst_27 = arith.constant dense<0.000000e+00> : vector<2x8x16xf32>
    %60 = tpu.matmul %12, %59, %cst_27 {dimension_numbers = #tpu.dot_dimension_numbers<[2], [1], [1], [2], [0, 0, 0, 1, 1, 2], [0], [0]>} : vector<2x8x8xf32>, vector<2x8x16xf32>, vector<2x8x16xf32> -> vector<2x8x16xf32>
    "tpu.trace_stop"() : () -> ()
    %c0_28 = arith.constant 0 : index
    %c0_29 = arith.constant 0 : index
    %c0_30 = arith.constant 0 : index
    %61 = vector.load %arg5[%c0_28, %c0_29, %c0_30] : memref<2x8x16xf32, #tpu.memory_space<vmem>>, vector<2x8x16xf32>
    tpu.vector_store %arg5[%c0_28, %c0_29, %c0_30], %60 {strides = array<i32>} : memref<2x8x16xf32, #tpu.memory_space<vmem>>, vector<2x8x16xf32>,
    return
  }
}

</mosaic_0001>

<llo_original>
// kernel: tpu_custom_call.1
$region0: #{tpu_custom_call.1}
  #allocation0 [shape = 'u32[]', space=smem, size = 0x4, offset = 0x4, fixed_abs, tag = 'smem constant byte address 0x4 - core index']
  #allocation1 [shape = 'u32[72,128]{1,0:T(1,128)}', space=vmem, size = 0x9000, scoped, tag = 'internal scratch']
  %s0 = inlined_call_operand.hbm [shape: f32[2,8,8], index: 0, kind: input, shape index: {}]
  %s1 = inlined_call_operand.hbm [shape: f32[8,8], index: 1, kind: input, shape index: {}]
  %s2 = inlined_call_operand.hbm [shape: f32[8,16], index: 2, kind: input, shape index: {}]
  %s3 = inlined_call_operand.hbm [shape: f32[8,8], index: 3, kind: input, shape index: {}]
  %s4 = inlined_call_operand.hbm [shape: f32[8,16], index: 4, kind: input, shape index: {}]
  %s5 = inlined_call_operand.hbm [shape: f32[2,8,16], index: 5, kind: output, shape index: {}]
  %s6 = sld [smem:[#allocation0]]
  $region50: #{tpu_custom_call.1} parent=0
    _
  %s8 = ssub.s32 1, %s6
  %s9 = scalar_select 0, %s8, %s6
  $region1: #{tpu_custom_call.1} parent=0
    #allocation2 [shape = 'u8[8192]{0}', space=vmem, size = 0x2000, scoped, tag = 'input window, operand 0, single buffered']
    #allocation3 [shape = 's32[1]{0}', space=sflag, size = 0x4, scoped, tag = 'scoped memory for tpu_custom_call.1']
    #allocation4 [shape = 's32[1]{0}', space=sflag, size = 0x4, scoped, tag = 'scoped memory for tpu_custom_call.1']
    #allocation5 [shape = 'u8[4096]{0}', space=vmem, size = 0x1000, scoped, tag = 'input window, operand 1, single buffered']
    #allocation6 [shape = 's32[1]{0}', space=sflag, size = 0x4, scoped, tag = 'scoped memory for tpu_custom_call.1']
    #allocation7 [shape = 'u8[4096]{0}', space=vmem, size = 0x1000, scoped, tag = 'input window, operand 2, single buffered']
    #allocation8 [shape = 'u8[4096]{0}', space=vmem, size = 0x1000, scoped, tag = 'input window, operand 3, single buffered']
    #allocation9 [shape = 's32[1]{0}', space=sflag, size = 0x4, scoped, tag = 'scoped memory for tpu_custom_call.1']
    #allocation10 [shape = 'u8[4096]{0}', space=vmem, size = 0x1000, scoped, tag = 'input window, operand 4, single buffered']
    #allocation11 [shape = 'u8[8192]{0}', space=vmem, size = 0x2000, scoped, tag = 'output window, operand 0, single buffered']
    %10 = vsyncpa [#allocation3], 0
    %11 = vsyncpa [#allocation6], 0
    %12 = vsyncpa [#allocation9], 0
    %13 = vsyncpa [#allocation4], 0
    // Predicated region
    $region2: #{tpu_custom_call.1} parent=1 // pred_check
      _
    $region3: #{tpu_custom_call.1} parent=1 // pred_check_branch
      %15 = sbr.rel (0) target = $region5
    $region4: #{tpu_custom_call.1} parent=1 // pred_region
      %17 = vsyncadd [#allocation3], 0
      %s18 = sshll.u32 %s0, 4
      %s19 = int_to_ptr.hbm [resolvable:$true] %s18
      %s20 = sshll.u32 [#allocation2], 4
      %s21 = int_to_ptr.vmem [resolvable:$true] %s20
      %26 = dma.hbm_to_vmem [thread:$0]  %s19, 256, %s21, [#allocation3], 128, 128, 8
    $region5: #{tpu_custom_call.1} parent=1 // pred_fallthru
      _
    // Predicated region
    $region6: #{tpu_custom_call.1} parent=1 // pred_check
      _
    $region7: #{tpu_custom_call.1} parent=1 // pred_check_branch
      %28 = sbr.rel (0) target = $region9
    $region8: #{tpu_custom_call.1} parent=1 // pred_region
      %30 = vsyncadd [#allocation6], 0
      %s32 = sshll.u32 %s1, 4
      %s33 = int_to_ptr.hbm [resolvable:$true] %s32
      %s34 = sshll.u32 [#allocation5], 4
      %s35 = int_to_ptr.vmem [resolvable:$true] %s34
      %37 = dma.hbm_to_vmem [thread:$0]  %s33, 128, %s35, [#allocation6]
    $region9: #{tpu_custom_call.1} parent=1 // pred_fallthru
      _
    // Predicated region
    $region10: #{tpu_custom_call.1} parent=1 // pred_check
      _
    $region11: #{tpu_custom_call.1} parent=1 // pred_check_branch
      %39 = sbr.rel (0) target = $region13
    $region12: #{tpu_custom_call.1} parent=1 // pred_region
      %41 = vsyncadd [#allocation6], 0
      %s43 = sshll.u32 %s2, 4
      %s44 = int_to_ptr.hbm [resolvable:$true] %s43
      %s45 = sshll.u32 [#allocation7], 4
      %s46 = int_to_ptr.vmem [resolvable:$true] %s45
      %48 = dma.hbm_to_vmem [thread:$0]  %s44, 128, %s46, [#allocation6]
    $region13: #{tpu_custom_call.1} parent=1 // pred_fallthru
      _
    // Predicated region
    $region14: #{tpu_custom_call.1} parent=1 // pred_check
      _
    $region15: #{tpu_custom_call.1} parent=1 // pred_check_branch
      %50 = sbr.rel (0) target = $region17
    $region16: #{tpu_custom_call.1} parent=1 // pred_region
      %52 = vsyncadd [#allocation9], 0
      %s54 = sshll.u32 %s3, 4
      %s55 = int_to_ptr.hbm [resolvable:$true] %s54
      %s56 = sshll.u32 [#allocation8], 4
      %s57 = int_to_ptr.vmem [resolvable:$true] %s56
      %59 = dma.hbm_to_vmem [thread:$0]  %s55, 128, %s57, [#allocation9]
    $region17: #{tpu_custom_call.1} parent=1 // pred_fallthru
      _
    // Predicated region
    $region18: #{tpu_custom_call.1} parent=1 // pred_check
      _
    $region19: #{tpu_custom_call.1} parent=1 // pred_check_branch
      %61 = sbr.rel (0) target = $region21
    $region20: #{tpu_custom_call.1} parent=1 // pred_region
      %63 = vsyncadd [#allocation9], 0
      %s65 = sshll.u32 %s4, 4
      %s66 = int_to_ptr.hbm [resolvable:$true] %s65
      %s67 = sshll.u32 [#allocation10], 4
      %s68 = int_to_ptr.vmem [resolvable:$true] %s67
      %70 = dma.hbm_to_vmem [thread:$0]  %s66, 128, %s68, [#allocation9]
    $region21: #{tpu_custom_call.1} parent=1 // pred_fallthru
      _
    // Predicated region
    $region22: #{tpu_custom_call.1} parent=1 // pred_check
      _
    $region23: #{tpu_custom_call.1} parent=1 // pred_check_branch
      %72 = sbr.rel (0) target = $region25
    $region24: #{tpu_custom_call.1} parent=1 // pred_region
      %74 = dma.done [#allocation3], 256
    $region25: #{tpu_custom_call.1} parent=1 // pred_fallthru
      _
    // Predicated region
    $region26: #{tpu_custom_call.1} parent=1 // pred_check
      _
    $region27: #{tpu_custom_call.1} parent=1 // pred_check_branch
      %76 = sbr.rel (0) target = $region29
    $region28: #{tpu_custom_call.1} parent=1 // pred_region
      %78 = dma.done [#allocation6], 128
    $region29: #{tpu_custom_call.1} parent=1 // pred_fallthru
      _
    // Predicated region
    $region30: #{tpu_custom_call.1} parent=1 // pred_check
      _
    $region31: #{tpu_custom_call.1} parent=1 // pred_check_branch
      %80 = sbr.rel (0) target = $region33
    $region32: #{tpu_custom_call.1} parent=1 // pred_region
      %82 = dma.done [#allocation6], 128
    $region33: #{tpu_custom_call.1} parent=1 // pred_fallthru
      _
    // Predicated region
    $region34: #{tpu_custom_call.1} parent=1 // pred_check
      _
    $region35: #{tpu_custom_call.1} parent=1 // pred_check_branch
      %84 = sbr.rel (0) target = $region37
    $region36: #{tpu_custom_call.1} parent=1 // pred_region
      %86 = dma.done [#allocation9], 128
    $region37: #{tpu_custom_call.1} parent=1 // pred_fallthru
      _
    // Predicated region
    $region38: #{tpu_custom_call.1} parent=1 // pred_check
      _
    $region39: #{tpu_custom_call.1} parent=1 // pred_check_branch
      %88 = sbr.rel (0) target = $region41
    $region40: #{tpu_custom_call.1} parent=1 // pred_region
      %90 = dma.done [#allocation9], 128
    $region41: #{tpu_custom_call.1} parent=1 // pred_fallthru
      _
    %v91 = vld [vmem:[#allocation2] sm:$0xff]
    %v92 = vld [vmem:[#allocation2 + $0x8] sm:$0xff]
    %v93 = vld [vmem:[#allocation5] sm:$0xff]
    %v94 = vmul.f32 %v93, 0.25
    %vm95 = vcmask 64512
    %v97 = vsel %vm95, %v91, 0
    %v100 = vsel %vm95, %v92, 0
    %102 = vmatpush.msra.mxu0 0.0
    %103 = vmatpush.msra.mxu0 0.0
    %104 = vmatpush.msra.mxu0 0.0
    %105 = vmatpush.msra.mxu0 0.0
    %106 = vmatpush.msra.mxu0 0.0
    %107 = vmatpush.msra.mxu0 0.0
    %108 = vmatpush.msra.mxu0 0.0
    %109 = vmatpush.msra.mxu0 0.0
    %110 = vmatpush.msra.mxu0 0.0
    %111 = vmatpush.msra.mxu0 0.0
    %112 = vmatpush.msra.mxu0 0.0
    %113 = vmatpush.msra.mxu0 0.0
    %114 = vmatpush.msra.mxu0 0.0
    %115 = vmatpush.msra.mxu0 0.0
    %116 = vmatpush.msra.mxu0 0.0
    %117 = vmatpush.msra.mxu0 %v94
    %118 = vmatmul.f32.gmra.mxu0 %v97
    %v119 = vpop.f32.mrf.mxu0
    %v120 = vadd.f32 0.0, %v119
    %121 = vmatmul.f32.gmra.mxu0 %v100
    %v122 = vpop.f32.mrf.mxu0
    %v123 = vadd.f32 0.0, %v122
    %124 = vdwg.mxu0
    %v125 = vld [vmem:[#allocation7] sm:$0xff]
    %126 = vmatpush.msra.mxu0 0.0
    %127 = vmatpush.msra.mxu0 0.0
    %128 = vmatpush.msra.mxu0 0.0
    %129 = vmatpush.msra.mxu0 0.0
    %130 = vmatpush.msra.mxu0 0.0
    %131 = vmatpush.msra.mxu0 0.0
    %132 = vmatpush.msra.mxu0 0.0
    %133 = vmatpush.msra.mxu0 0.0
    %134 = vmatpush.msra.mxu0 0.0
    %135 = vmatpush.msra.mxu0 0.0
    %136 = vmatpush.msra.mxu0 0.0
    %137 = vmatpush.msra.mxu0 0.0
    %138 = vmatpush.msra.mxu0 0.0
    %139 = vmatpush.msra.mxu0 0.0
    %140 = vmatpush.msra.mxu0 0.0
    %141 = vmatpush.msra.mxu0 %v125
    %142 = vmatmul.f32.gmra.mxu0 %v97
    %v143 = vpop.f32.mrf.mxu0
    %v144 = vadd.f32 0.0, %v143
    %145 = vmatmul.f32.gmra.mxu0 %v100
    %v146 = vpop.f32.mrf.mxu0
    %v147 = vadd.f32 0.0, %v146
    %148 = vdwg.mxu0
    %v149 = vld [vmem:[#allocation8] sm:$0xff]
    %150 = vmatpush.msra.mxu0 0.0
    %151 = vmatpush.msra.mxu0 0.0
    %152 = vmatpush.msra.mxu0 0.0
    %153 = vmatpush.msra.mxu0 0.0
    %154 = vmatpush.msra.mxu0 0.0
    %155 = vmatpush.msra.mxu0 0.0
    %156 = vmatpush.msra.mxu0 0.0
    %157 = vmatpush.msra.mxu0 0.0
    %158 = vmatpush.msra.mxu0 0.0
    %159 = vmatpush.msra.mxu0 0.0
    %160 = vmatpush.msra.mxu0 0.0
    %161 = vmatpush.msra.mxu0 0.0
    %162 = vmatpush.msra.mxu0 0.0
    %163 = vmatpush.msra.mxu0 0.0
    %164 = vmatpush.msra.mxu0 0.0
    %165 = vmatpush.msra.mxu0 %v149
    %166 = vmatmul.f32.gmra.mxu0 %v97
    %v167 = vpop.f32.mrf.mxu0
    %v168 = vadd.f32 0.0, %v167
    %169 = vmatmul.f32.gmra.mxu0 %v100
    %v170 = vpop.f32.mrf.mxu0
    %v171 = vadd.f32 0.0, %v170
    %172 = vdwg.mxu0
    %173 = vxpose.xlu0.b32.start [1/16] %v120, 128
    %174 = vxpose.xlu0.b32.cont [2/16] 0.0, 128
    %175 = vxpose.xlu0.b32.cont [3/16] 0.0, 128
    %176 = vxpose.xlu0.b32.cont [4/16] 0.0, 128
    %177 = vxpose.xlu0.b32.cont [5/16] 0.0, 128
    %178 = vxpose.xlu0.b32.cont [6/16] 0.0, 128
    %179 = vxpose.xlu0.b32.cont [7/16] 0.0, 128
    %180 = vxpose.xlu0.b32.cont [8/16] 0.0, 128
    %181 = vxpose.xlu0.b32.cont [9/16] 0.0, 128
    %182 = vxpose.xlu0.b32.cont [10/16] 0.0, 128
    %183 = vxpose.xlu0.b32.cont [11/16] 0.0, 128
    %184 = vxpose.xlu0.b32.cont [12/16] 0.0, 128
    %185 = vxpose.xlu0.b32.cont [13/16] 0.0, 128
    %186 = vxpose.xlu0.b32.cont [14/16] 0.0, 128
    %187 = vxpose.xlu0.b32.cont [15/16] 0.0, 128
    %188 = vxpose.xlu0.b32.end [16/16] 0.0, 128
    %v189 = vpop.trf.xlu0
    %v190 = vpop.trf.xlu0
    %v191 = vpop.trf.xlu0
    %v192 = vpop.trf.xlu0
    %v193 = vpop.trf.xlu0
    %v194 = vpop.trf.xlu0
    %v195 = vpop.trf.xlu0
    %v196 = vpop.trf.xlu0
    %v197 = vpop.trf.xlu0
    %v198 = vpop.trf.xlu0
    %v199 = vpop.trf.xlu0
    %v200 = vpop.trf.xlu0
    %v201 = vpop.trf.xlu0
    %v202 = vpop.trf.xlu0
    %v203 = vpop.trf.xlu0
    %v204 = vpop.trf.xlu0
    %205 = vxpose.xlu0.b32.start [1/16] %v123, 128
    %206 = vxpose.xlu0.b32.cont [2/16] 0.0, 128
    %207 = vxpose.xlu0.b32.cont [3/16] 0.0, 128
    %208 = vxpose.xlu0.b32.cont [4/16] 0.0, 128
    %209 = vxpose.xlu0.b32.cont [5/16] 0.0, 128
    %210 = vxpose.xlu0.b32.cont [6/16] 0.0, 128
    %211 = vxpose.xlu0.b32.cont [7/16] 0.0, 128
    %212 = vxpose.xlu0.b32.cont [8/16] 0.0, 128
    %213 = vxpose.xlu0.b32.cont [9/16] 0.0, 128
    %214 = vxpose.xlu0.b32.cont [10/16] 0.0, 128
    %215 = vxpose.xlu0.b32.cont [11/16] 0.0, 128
    %216 = vxpose.xlu0.b32.cont [12/16] 0.0, 128
    %217 = vxpose.xlu0.b32.cont [13/16] 0.0, 128
    %218 = vxpose.xlu0.b32.cont [14/16] 0.0, 128
    %219 = vxpose.xlu0.b32.cont [15/16] 0.0, 128
    %220 = vxpose.xlu0.b32.end [16/16] 0.0, 128
    %v221 = vpop.trf.xlu0
    %v222 = vpop.trf.xlu0
    %v223 = vpop.trf.xlu0
    %v224 = vpop.trf.xlu0
    %v225 = vpop.trf.xlu0
    %v226 = vpop.trf.xlu0
    %v227 = vpop.trf.xlu0
    %v228 = vpop.trf.xlu0
    %v229 = vpop.trf.xlu0
    %v230 = vpop.trf.xlu0
    %v231 = vpop.trf.xlu0
    %v232 = vpop.trf.xlu0
    %v233 = vpop.trf.xlu0
    %v234 = vpop.trf.xlu0
    %v235 = vpop.trf.xlu0
    %v236 = vpop.trf.xlu0
    %v238 = vsel %vm95, %v189, 0
    %240 = vmatpush.msra.mxu0 0.0
    %241 = vmatpush.msra.mxu0 0.0
    %242 = vmatpush.msra.mxu0 0.0
    %243 = vmatpush.msra.mxu0 0.0
    %244 = vmatpush.msra.mxu0 0.0
    %245 = vmatpush.msra.mxu0 0.0
    %246 = vmatpush.msra.mxu0 0.0
    %247 = vmatpush.msra.mxu0 0.0
    %248 = vmatpush.msra.mxu0 0.0
    %249 = vmatpush.msra.mxu0 0.0
    %250 = vmatpush.msra.mxu0 0.0
    %251 = vmatpush.msra.mxu0 0.0
    %252 = vmatpush.msra.mxu0 0.0
    %253 = vmatpush.msra.mxu0 0.0
    %254 = vmatpush.msra.mxu0 0.0
    %255 = vmatpush.msra.mxu0 %v144
    %256 = vmatmul.f32.gmra.mxu0 %v238
    %v257 = vpop.f32.mrf.mxu0
    %v258 = vadd.f32 0.0, %v257
    %259 = vdwg.mxu0
    %v261 = vsel %vm95, %v221, 0
    %263 = vmatpush.msra.mxu0 0.0
    %264 = vmatpush.msra.mxu0 0.0
    %265 = vmatpush.msra.mxu0 0.0
    %266 = vmatpush.msra.mxu0 0.0
    %267 = vmatpush.msra.mxu0 0.0
    %268 = vmatpush.msra.mxu0 0.0
    %269 = vmatpush.msra.mxu0 0.0
    %270 = vmatpush.msra.mxu0 0.0
    %271 = vmatpush.msra.mxu0 0.0
    %272 = vmatpush.msra.mxu0 0.0
    %273 = vmatpush.msra.mxu0 0.0
    %274 = vmatpush.msra.mxu0 0.0
    %275 = vmatpush.msra.mxu0 0.0
    %276 = vmatpush.msra.mxu0 0.0
    %277 = vmatpush.msra.mxu0 0.0
    %278 = vmatpush.msra.mxu0 %v147
    %279 = vmatmul.f32.gmra.mxu0 %v261
    %v280 = vpop.f32.mrf.mxu0
    %v281 = vadd.f32 0.0, %v280
    %282 = vdwg.mxu0
    %v283 = vld [vmem:[#allocation10] sm:$0xff]
    %vm284 = vcmp.gt.f32.partialorder %v283, 0.0
    %v285 = vsel %vm284, 1, 0
    %vm286 = vcmp.eq.s32.totalorder %v285, 1
    %v287 = vsel %vm286, %v258, 9e+15
    %v288 = vsel %vm286, %v281, 9e+15
    %vm289 = vcmask 130048
    %v290 = vsel %vm289, %v287, inf
    %291 = vmin.xlane.f32.xlu0 %v290
    %v292 = vpop.xlane.xlu0 %291
    %v293 = vsel %vm289, %v288, inf
    %294 = vmin.xlane.f32.xlu0 %v293
    %v295 = vpop.xlane.xlu0 %294
    %v296 = vsel %vm286, %v258, -9e+15
    %v297 = vsel %vm286, %v281, -9e+15
    %v298 = vsel %vm289, %v296, -inf
    %299 = vmax.xlane.f32.xlu0 %v298
    %v300 = vpop.xlane.xlu0 %299
    %v301 = vsel %vm289, %v297, -inf
    %302 = vmax.xlane.f32.xlu0 %v301
    %v303 = vpop.xlane.xlu0 %302
    %v304 = vsub.f32 %v300, %v292
    %v305 = vsub.f32 %v303, %v295
    %vm306 = vcmp.eq.f32.partialorder %v304, 0.0
    %vm307 = vcmp.eq.f32.partialorder %v305, 0.0
    %v308 = vsel %vm306, 1e-06, %v304
    %v309 = vsel %vm307, 1e-06, %v305
    %v310 = vsub.f32 %v258, %v292
    %v311 = vsub.f32 %v281, %v295
    %v312 = vrcp.pop %v308
    %v313 = vmul.f32 %v308, %v312
    %v314 = vsub.f32 1.0, %v313
    %v315 = vmul.f32 %v312, %v314
    %v316 = vadd.f32 %v312, %v315
    %vm317 = vweird.f32 %v308
    %vm318 = vweird.f32 %v312
    %vm319 = vmor %vm317, %vm318
    %v320 = vsel %vm319, %v312, %v316
    %v321 = vand.u32 2147483647, %v308
    %vm322 = vcmp.eq.f32.partialorder %v321, 8.507059e+37
    %v323 = vand.u32 %v308, 2147483648
    %v324 = vor.u32 1.1754944e-38, %v323
    %v325 = vsel %vm322, %v324, %v320
    %v326 = vrcp.pop %v309
    %v327 = vmul.f32 %v309, %v326
    %v328 = vsub.f32 1.0, %v327
    %v329 = vmul.f32 %v326, %v328
    %v330 = vadd.f32 %v326, %v329
    %vm331 = vweird.f32 %v309
    %vm332 = vweird.f32 %v326
    %vm333 = vmor %vm331, %vm332
    %v334 = vsel %vm333, %v326, %v330
    %v335 = vand.u32 2147483647, %v309
    %vm336 = vcmp.eq.f32.partialorder %v335, 8.507059e+37
    %v337 = vand.u32 %v309, 2147483648
    %v338 = vor.u32 1.1754944e-38, %v337
    %v339 = vsel %vm336, %v338, %v334
    %v340 = vmul.f32 %v310, %v325
    %v341 = vmul.f32 %v311, %v339
    %v342 = vsel %vm286, %v340, -9e+15
    %v343 = vsel %vm286, %v341, -9e+15
    %v344 = vsub.f32 %v342, 1.0
    %v345 = vsub.f32 %v343, 1.0
    %v346 = vmul.f32 %v344, 1.442695
    %v347 = vpow.pop %v346
    %v348 = vmul.f32 %v345, 1.442695
    %v349 = vpow.pop %v348
    %v350 = vsel %vm289, %v347, 0.0
    %351 = vadd.xlane.f32.xlu0 %v350
    %v352 = vpop.xlane.xlu0 %351
    %v353 = vsel %vm289, %v349, 0.0
    %354 = vadd.xlane.f32.xlu0 %v353
    %v355 = vpop.xlane.xlu0 %354
    %vm356 = vcmp.gt.f32.partialorder %v352, 0.0
    %vm357 = vcmp.gt.f32.partialorder %v355, 0.0
    %v358 = vrcp.pop %v352
    %v359 = vmul.f32 %v352, %v358
    %v360 = vsub.f32 1.0, %v359
    %v361 = vmul.f32 %v358, %v360
    %v362 = vadd.f32 %v358, %v361
    %vm363 = vweird.f32 %v352
    %vm364 = vweird.f32 %v358
    %vm365 = vmor %vm363, %vm364
    %v366 = vsel %vm365, %v358, %v362
    %v367 = vand.u32 2147483647, %v352
    %vm368 = vcmp.eq.f32.partialorder %v367, 8.507059e+37
    %v369 = vand.u32 %v352, 2147483648
    %v370 = vor.u32 1.1754944e-38, %v369
    %v371 = vsel %vm368, %v370, %v366
    %v372 = vrcp.pop %v355
    %v373 = vmul.f32 %v355, %v372
    %v374 = vsub.f32 1.0, %v373
    %v375 = vmul.f32 %v372, %v374
    %v376 = vadd.f32 %v372, %v375
    %vm377 = vweird.f32 %v355
    %vm378 = vweird.f32 %v372
    %vm379 = vmor %vm377, %vm378
    %v380 = vsel %vm379, %v372, %v376
    %v381 = vand.u32 2147483647, %v355
    %vm382 = vcmp.eq.f32.partialorder %v381, 8.507059e+37
    %v383 = vand.u32 %v355, 2147483648
    %v384 = vor.u32 1.1754944e-38, %v383
    %v385 = vsel %vm382, %v384, %v380
    %v386 = vmul.f32 %v347, %v371
    %v387 = vmul.f32 %v349, %v385
    %v388 = vsel %vm356, 1, 0
    %v389 = vsel %vm357, 1, 0
    %vm390 = vcmp.eq.s32.totalorder %v388, 1
    %vm391 = vcmp.eq.s32.totalorder %v389, 1
    %v392 = vsel %vm390, %v386, 0.0625
    %v393 = vsel %vm391, %v387, 0.0625
    %v395 = vsel %vm95, %v168, 0
    %397 = vmatpush.msra.mxu0 0.0
    %398 = vmatpush.msra.mxu0 0.0
    %399 = vmatpush.msra.mxu0 0.0
    %400 = vmatpush.msra.mxu0 0.0
    %401 = vmatpush.msra.mxu0 0.0
    %402 = vmatpush.msra.mxu0 0.0
    %403 = vmatpush.msra.mxu0 0.0
    %404 = vmatpush.msra.mxu0 0.0
    %405 = vmatpush.msra.mxu0 0.0
    %406 = vmatpush.msra.mxu0 0.0
    %407 = vmatpush.msra.mxu0 0.0
    %408 = vmatpush.msra.mxu0 0.0
    %409 = vmatpush.msra.mxu0 0.0
    %410 = vmatpush.msra.mxu0 0.0
    %411 = vmatpush.msra.mxu0 0.0
    %412 = vmatpush.msra.mxu0 %v392
    %413 = vmatmul.f32.gmra.mxu0 %v395
    %v414 = vpop.f32.mrf.mxu0
    %v415 = vadd.f32 0.0, %v414
    %416 = vdwg.mxu0
    %v418 = vsel %vm95, %v171, 0
    %420 = vmatpush.msra.mxu0 0.0
    %421 = vmatpush.msra.mxu0 0.0
    %422 = vmatpush.msra.mxu0 0.0
    %423 = vmatpush.msra.mxu0 0.0
    %424 = vmatpush.msra.mxu0 0.0
    %425 = vmatpush.msra.mxu0 0.0
    %426 = vmatpush.msra.mxu0 0.0
    %427 = vmatpush.msra.mxu0 0.0
    %428 = vmatpush.msra.mxu0 0.0
    %429 = vmatpush.msra.mxu0 0.0
    %430 = vmatpush.msra.mxu0 0.0
    %431 = vmatpush.msra.mxu0 0.0
    %432 = vmatpush.msra.mxu0 0.0
    %433 = vmatpush.msra.mxu0 0.0
    %434 = vmatpush.msra.mxu0 0.0
    %435 = vmatpush.msra.mxu0 %v393
    %436 = vmatmul.f32.gmra.mxu0 %v418
    %v437 = vpop.f32.mrf.mxu0
    %v438 = vadd.f32 0.0, %v437
    %439 = vdwg.mxu0
    %440 = vst.msk [vmem:[#allocation11] sm:$0xff] %vm289, %v415
    %441 = vst.msk [vmem:[#allocation11 + $0x8] sm:$0xff] %vm289, %v438
    // Predicated region
    $region42: #{tpu_custom_call.1} parent=1 // pred_check
      _
    $region43: #{tpu_custom_call.1} parent=1 // pred_check_branch
      %443 = sbr.rel (0) target = $region45
    $region44: #{tpu_custom_call.1} parent=1 // pred_region
      %445 = vsyncadd [#allocation4], 0
      %s446 = sshll.u32 [#allocation11], 4
      %s447 = int_to_ptr.vmem [resolvable:$true] %s446
      %s448 = sshll.u32 %s5, 4
      %s449 = int_to_ptr.hbm [resolvable:$true] %s448
      %454 = dma.vmem_to_hbm [thread:$0]  %s447, 256, %s449, [#allocation4], 128, 128, 8
    $region45: #{tpu_custom_call.1} parent=1 // pred_fallthru
      _
    // Predicated region
    $region46: #{tpu_custom_call.1} parent=1 // pred_check
      _
    $region47: #{tpu_custom_call.1} parent=1 // pred_check_branch
      %456 = sbr.rel (0) target = $region49
    $region48: #{tpu_custom_call.1} parent=1 // pred_region
      %458 = dma.done [#allocation4], 256
    $region49: #{tpu_custom_call.1} parent=1 // pred_fallthru
      _
    %459 = vsyncpa [#allocation3], 1
    %460 = vsyncpa [#allocation6], 1
    %461 = vsyncpa [#allocation9], 1
    %462 = vsyncpa [#allocation4], 1

</llo_original>
